<compile_context>
chip_gen: v7x
topology: tpu7x:2x2x1
jax: 0.10.0
libtpu: 0.0.40
codegen_flags: <defaults>
</compile_context>

<pallas_src>
import math

import jax
import jax.numpy as jnp
from jax import lax
from jax.experimental import pallas as pl
from jax.experimental.pallas import tpu as pltpu


def _round_up(x, m):
    return (x + m - 1) // m * m


def _full_spec(shape):
    """BlockSpec covering the whole array (block == array)."""
    nd = len(shape)
    return pl.BlockSpec(shape, lambda *_args, _nd=nd: (0,) * _nd)


# ---------------------------------------------------------------------------
# Kernel 1: id classifier  y = x @ W + b   (bf16 MXU inputs, f32 accumulation)
# Image and text features share one call so the big weight is read once.
# ---------------------------------------------------------------------------
def _classifier_kernel(x_ref, w_ref, b_ref, o_ref):
    acc = jnp.dot(x_ref[...], w_ref[...], preferred_element_type=jnp.float32)
    o_ref[...] = acc + b_ref[...]


def _choose_cls_tiling(n, tile_n=1024):
    """Lane-aligned N tile: large (few ~0.35us grid steps) but >=2 tiles when
    possible so the 'parallel' axis can feed both v7x TensorCores."""
    n128 = _round_up(n, 128)
    tn = min(_round_up(tile_n, 128), max(128, _round_up((n128 + 1) // 2, 128)))
    return tn, _round_up(n128, tn)


def classifier_logits(x, w_padded, b_padded, n_out, tile_n):
    """x: (M, K) f32.  w_padded: (Kp, Np) bf16, b_padded: (1, Np) f32 -- both
    pre-padded / pre-cast at parameter-init time (no per-call weight traffic)."""
    M, K = x.shape
    Kp, Np = w_padded.shape
    assert K <= Kp and Np % tile_n == 0
    Mp = _round_up(M, 8)
    # Only the tiny activation is padded/cast per forward.
    x_p = jnp.zeros((Mp, Kp), jnp.bfloat16).at[:M, :K].set(x.astype(jnp.bfloat16))
    cost = pl.CostEstimate(
        flops=2 * Mp * Kp * Np,
        transcendentals=0,
        bytes_accessed=Kp * Np * 2 + Mp * Kp * 2 + Np * 4 + Mp * Np * 4,
    )
    out = pl.pallas_call(
        _classifier_kernel,
        grid=(Np // tile_n,),
        in_specs=[
            pl.BlockSpec((Mp, Kp), lambda j: (0, 0)),
            pl.BlockSpec((Kp, tile_n), lambda j: (0, j)),
            pl.BlockSpec((1, tile_n), lambda j: (0, j)),
        ],
        out_specs=pl.BlockSpec((Mp, tile_n), lambda j: (0, j)),
        out_shape=jax.ShapeDtypeStruct((Mp, Np), jnp.float32),
        compiler_params=pltpu.CompilerParams(
            dimension_semantics=("parallel",),   # shard N tiles across TCs (v7x)
            vmem_limit_bytes=64 * 1024 * 1024,
        ),
        cost_estimate=cost,
    )(x_p, w_padded, b_padded)
    return out[:M, :n_out]


# ---------------------------------------------------------------------------
# Kernel 2: fused add_gaussian_noisy + FPN token means (style2, style3).
# Input v: (B, hp, wp, D) channels-last patch map (non-CLS image tokens).
# e1/e2/em/es: (B, D) standard-normal draws supplied from JAX; the kernel
# turns them into Normal(mu_mu, mu_sigma) / Normal(sigma_mu, sigma_sigma)
# per-sample draws exactly as torch.distributions .sample([b]) does.
# torch.std_mean uses the unbiased estimator (correction=1).
# Outputs:
#   style2 = token mean of the restyled map  == style_mu   (fpn3 Identity)
#   style3 = token mean of 2x2 max-pooled restyled map      (fpn4 MaxPool2d)
# The restyled map never leaves VMEM and is only formed strip-by-strip.
# ---------------------------------------------------------------------------
def _pick_strip(b, hp, wp, d, max_elems=32768):
    """Largest even divisor of hp (<=8) whose (b,strip,wp,d) f32 strip stays
    a few dozen vregs."""
    for s in (8, 6, 4, 2):
        if hp % s == 0 and b * s * wp * d <= max_elems:
            return s
    return 2


def _style_fused_kernel(v_ref, e1_ref, e2_ref, em_ref, es_ref, s2_ref, s3_ref):
    B, hp, wp, D = v_ref.shape
    L = hp * wp
    strip = _pick_strip(B, hp, wp, D)
    n_strips = hp // strip

    # ---- pass 1: per-image token mean (streamed over hp-row strips) ----
    def _sum_body(i, acc):
        r0 = pl.multiple_of(i * strip, strip)
        return acc + jnp.sum(v_ref[:, pl.ds(r0, strip), :, :], axis=(1, 2))

    mu = lax.fori_loop(0, n_strips, _sum_body,
                       jnp.zeros((B, D), jnp.float32)) * (1.0 / L)

    # ---- pass 2: per-image unbiased variance (torch.std_mean, correction=1) ----
    def _var_body(i, acc):
        r0 = pl.multiple_of(i * strip, strip)
        d = v_ref[:, pl.ds(r0, strip), :, :] - mu[:, None, None, :]
        return acc + jnp.sum(d * d, axis=(1, 2))

    var = lax.fori_loop(0, n_strips, _var_body,
                        jnp.zeros((B, D), jnp.float32)) * (1.0 / (L - 1))
    sigma = jnp.sqrt(var)
    inv_sigma = lax.rsqrt(var)   # EUP rsqrt; no eps guard (matches torch /0 behavior)

    # ---- batch statistics of (mu, sigma), unbiased over B ----
    mu_mu = jnp.mean(mu, axis=0, keepdims=True)
    mu_sigma = jnp.sqrt(
        jnp.sum((mu - mu_mu) ** 2, axis=0, keepdims=True) * (1.0 / (B - 1)))
    sigma_mu = jnp.mean(sigma, axis=0, keepdims=True)
    sigma_sigma = jnp.sqrt(
        jnp.sum((sigma - sigma_mu) ** 2, axis=0, keepdims=True) * (1.0 / (B - 1)))

    # per-sample draws against the (1, D) batch stats (torch .sample([b]))
    alpha = mu_mu + e1_ref[...] * mu_sigma
    beta = sigma_mu + e2_ref[...] * sigma_sigma
    style_mu = mu + em_ref[...] * alpha                       # (B, D)
    style_sigma = sigma + es_ref[...] * beta                  # (B, D)

    # restyle folded to sv = scale * v + offset  (diff never re-materialized)
    scale = style_sigma * inv_sigma                           # (B, D)
    offset = style_mu - scale * mu                            # (B, D)

    # style2 == mean_tokens(sv) == style_mu  (mean of scale*(v - mu) is 0)
    s2_ref[...] = style_mu

    # ---- pass 3: restyle + 2x2 max-pool + mean (streamed) ----
    # Column pairs via a single sublane roll (XLU) + a pair mask.  The mask is
    # built from a rolled iota, so it selects exactly one row per {2k, 2k+1}
    # pooled pair regardless of the roll direction convention, and wrap /
    # cross-pair rows are excluded automatically.
    rows_per_strip = B * (strip // 2) * wp
    row_ids = lax.broadcasted_iota(jnp.int32, (rows_per_strip, D), 0)
    rolled_ids = pltpu.roll(row_ids, shift=1, axis=0)
    delta = rolled_ids - row_ids
    adjacent = (delta == 1) | (delta == -1)
    lo_even = (jnp.minimum(rolled_ids, row_ids) & 1) == 0
    pool_mask = (adjacent & lo_even).astype(jnp.float32)

    sc = scale[:, None, None, :]
    off = offset[:, None, None, :]

    def _pool_body(i, acc):
        r0 = pl.multiple_of(i * strip, strip)
        sv = sc * v_ref[:, pl.ds(r0, strip), :, :] + off          # (B,strip,wp,D)
        svr = sv.reshape(B, strip // 2, 2, wp, D)                 # split rows (free)
        rmax = jnp.maximum(svr[:, :, 0], svr[:, :, 1])            # row-pair max
        flat = rmax.reshape(rows_per_strip, D)                    # leading flatten
        pmax = jnp.maximum(flat, pltpu.roll(flat, shift=1, axis=0))
        cell = (pmax * pool_mask).reshape(B, (strip // 2) * wp, D)
        return acc + jnp.sum(cell, axis=1)

    s3 = lax.fori_loop(0, n_strips, _pool_body,
                       jnp.zeros((B, D), jnp.float32))
    s3_ref[...] = s3 * (1.0 / ((hp // 2) * (wp // 2)))


def add_gaussian_noisy_fused(v_map, noise):
    """Fused restyle + style2/style3 means.  Returns (style2, style3), each (B, D)."""
    B, hp, wp, D = v_map.shape
    assert hp % 2 == 0 and wp % 2 == 0, "2x2 max-pool level needs even hp, wp"
    e1, e2, em, es = noise
    # Single block over the batch: the batch statistics (mu_mu / sigma_sigma)
    # couple all B images.  TODO(synk): at production B split into a batch-tiled
    # stats pass + batch-tiled restyle/reduce pass (required on v7x 64 MiB VMEM);
    # on v5e/v6e simply raise vmem_limit_bytes instead.
    return pl.pallas_call(
        _style_fused_kernel,
        grid=(1,),
        in_specs=[_full_spec((B, hp, wp, D))] + [_full_spec((B, D))] * 4,
        out_specs=(_full_spec((B, D)), _full_spec((B, D))),
        out_shape=(jax.ShapeDtypeStruct((B, D), jnp.float32),
                   jax.ShapeDtypeStruct((B, D), jnp.float32)),
        compiler_params=pltpu.CompilerParams(
            dimension_semantics=("arbitrary",),
            vmem_limit_bytes=32 * 1024 * 1024,
        ),
    )(v_map.astype(jnp.float32), e1, e2, em, es)


# ---------------------------------------------------------------------------
# ADTNET forward (id + style branches; base_model outputs are inputs).
# ---------------------------------------------------------------------------
def adtnet_forward(params, batch, noise):
    image_feats = batch['image_feats']          # (B, 1 + hp*wp, D) float32
    text_feats = batch['text_feats']            # (B, T, D) float32
    caption_ids = batch['caption_ids']          # (B, T) int32
    pids = batch['pids']                        # (B,) int32

    B, _, D = image_feats.shape
    hp, wp = params['hp'], params['wp']

    ret = {'temperature': 1.0 / params['logit_scale']}

    # glue: CLS slice + EOT gather (the base CLIP encoders are external)
    i_feats = image_feats[:, 0, :].astype(jnp.float32)
    eot_idx = jnp.argmax(caption_ids, axis=-1)
    t_feats = jnp.take_along_axis(
        text_feats, eot_idx[:, None, None], axis=1)[:, 0, :].astype(jnp.float32)

    # ---- 'id' branch: classifier(feats.half()).float() ----
    # TODO(synk): torch uses fp16 (.half()); bf16 stands in on TPU, f32 accum.
    it_feats = jnp.concatenate([i_feats, t_feats], axis=0)          # (2B, D)
    logits = classifier_logits(it_feats, params['cls_w_padded'],
                               params['cls_b_padded'], params['num_classes'],
                               params['cls_tile_n'])
    image_logits, text_logits = logits[:B], logits[B:]
    ret['image_logits'] = image_logits
    ret['text_logits'] = text_logits
    ret['img_acc'] = jnp.mean(
        (jnp.argmax(image_logits, axis=1) == pids).astype(jnp.float32))
    ret['txt_acc'] = jnp.mean(
        (jnp.argmax(text_logits, axis=1) == pids).astype(jnp.float32))
    # TODO(synk): objectives.compute_id / compute_itc / compute_sdm / compute_cmpm
    # live outside this module and are not reimplemented.

    # ---- 'style' branch ----
    v_map = image_feats[:, 1:, :].reshape(B, hp, wp, D)   # channels-last map
    style2, style3 = add_gaussian_noisy_fused(v_map, noise)

    # style1 = mean_pixels(ConvTranspose2d(D, D, k=2, s=2)(style_map))
    #        = mean_tokens(style_map) @ mean_{kh,kw}(W) + b == style2 @ w_mean + b
    # (exact up to FP reassociation).  Tiny (B,D)x(D,D) matmul kept in f32 XLA,
    # matching torch's fp32 fpn path; w_mean is precomputed at init.
    style1 = jnp.dot(style2, params['fpn2_w_mean'],
                     precision=lax.Precision.HIGHEST) + params['fpn2_b']

    ret['style1'] = style1
    ret['style2'] = style2
    ret['style3'] = style3
    # TODO(synk): objectives.compute_style is external; the 'mlm' branch needs
    # base_model.encode_text + the external cross-modal Transformer /
    # nn.MultiheadAttention and is not reimplemented here.
    return ret


# ---------------------------------------------------------------------------
# deterministic parameter / input construction
# ---------------------------------------------------------------------------
def make_params(key, embed_dim, num_classes, patch_size, *, cls_tile_n=1024):
    hp, wp = 384 // patch_size, 128 // patch_size
    k1, k2, k3 = jax.random.split(key, 3)
    fan_in = embed_dim * 2 * 2

    # classifier: nn.init.normal_(std=0.001), bias 0
    cls_w = 0.001 * jax.random.normal(k1, (embed_dim, num_classes), jnp.float32)
    cls_b = jnp.zeros((num_classes,), jnp.float32)
    # fpn2 ConvTranspose2d weight (in, out, 2, 2) + bias (deterministic init)
    fpn2_w = jax.random.normal(k2, (embed_dim, embed_dim, 2, 2), jnp.float32) \
             / math.sqrt(fan_in)
    fpn2_b = 0.01 * jax.random.normal(k3, (embed_dim,), jnp.float32)

    # Pre-pad + pre-cast the classifier weight/bias ONCE (no per-forward cast).
    kp_dim = _round_up(embed_dim, 128)
    tn, np_dim = _choose_cls_tiling(num_classes, cls_tile_n)
    cls_w_padded = jnp.zeros((kp_dim, np_dim), jnp.bfloat16) \
        .at[:embed_dim, :num_classes].set(cls_w.astype(jnp.bfloat16))
    cls_b_padded = jnp.zeros((1, np_dim), jnp.float32) \
        .at[0, :num_classes].set(cls_b)

    return {
        'hp': hp,
        'wp': wp,
        'embed_dim': embed_dim,
        'num_classes': num_classes,
        'logit_scale': jnp.float32(1.0 / 0.02),
        'cls_w': cls_w,
        'cls_b': cls_b,
        'cls_w_padded': cls_w_padded,
        'cls_b_padded': cls_b_padded,
        'cls_tile_n': tn,
        'fpn2_w': fpn2_w,
        'fpn2_b': fpn2_b,
        'fpn2_w_mean': jnp.mean(fpn2_w, axis=(2, 3)),   # cached (D, D)
    }


if __name__ == "__main__":
    B, D = 2, 128
    patch_size = 16
    hp, wp = 384 // patch_size, 128 // patch_size     # 24, 8
    L_img = 1 + hp * wp                               # 193 (CLS + patches)
    T = 8                                             # caption length
    num_classes = 1000   # small stand-in for 11003

    root = jax.random.PRNGKey(0)
    kp, ki, kt, kc, kpid, kn = jax.random.split(root, 6)
    params = make_params(kp, D, num_classes, patch_size)

    batch = {
        'image_feats': jax.random.normal(ki, (B, L_img, D), jnp.float32),
        'text_feats': jax.random.normal(kt, (B, T, D), jnp.float32),
        'caption_ids': jax.random.randint(kc, (B, T), 0, 100, jnp.int32),
        'pids': jax.random.randint(kpid, (B,), 0, num_classes, jnp.int32),
    }
    n1, n2, n3, n4 = jax.random.split(kn, 4)
    noise = (jax.random.normal(n1, (B, D), jnp.float32),   # mu_dis sample eps
             jax.random.normal(n2, (B, D), jnp.float32),   # sigma_dis sample eps
             jax.random.normal(n3, (B, D), jnp.float32),   # ep_mu
             jax.random.normal(n4, (B, D), jnp.float32))   # ep_sigma

    ret = adtnet_forward(params, batch, noise)
    jax.block_until_ready(ret)

    # shape sanity
    assert ret['image_logits'].shape == (B, num_classes)
    assert ret['text_logits'].shape == (B, num_classes)
    assert ret['style1'].shape == (B, D)
    assert ret['style2'].shape == (B, D)
    assert ret['style3'].shape == (B, D)

    # -------------------- pure-JAX reference check --------------------
    # classifier (bf16-rounded operands, f32 accumulation)
    i_feats = batch['image_feats'][:, 0, :]
    eot = jnp.argmax(batch['caption_ids'], axis=-1)
    t_feats = jnp.take_along_axis(
        batch['text_feats'], eot[:, None, None], axis=1)[:, 0, :]
    it = jnp.concatenate([i_feats, t_feats], axis=0)
    ref_logits = jnp.dot(it.astype(jnp.bfloat16).astype(jnp.float32),
                         params['cls_w'].astype(jnp.bfloat16).astype(jnp.float32),
                         precision=lax.Precision.HIGHEST) + params['cls_b']
    got_logits = jnp.concatenate([ret['image_logits'], ret['text_logits']], axis=0)
    assert bool(jnp.allclose(got_logits, ref_logits, rtol=5e-2, atol=5e-4)), "logits"

    # add_gaussian_noisy + FPN means (torch.std_mean is unbiased, ddof=1)
    v = batch['image_feats'][:, 1:, :]
    mu = jnp.mean(v, axis=1)
    sg = jnp.std(v, axis=1, ddof=1)
    mu_mu = jnp.mean(mu, axis=0, keepdims=True)
    mu_sg = jnp.std(mu, axis=0, ddof=1, keepdims=True)
    sg_mu = jnp.mean(sg, axis=0, keepdims=True)
    sg_sg = jnp.std(sg, axis=0, ddof=1, keepdims=True)
    e1, e2, em, es = noise
    style_mu = mu + em * (mu_mu + e1 * mu_sg)
    style_sg = sg + es * (sg_mu + e2 * sg_sg)
    y = style_sg[:, None, :] * (v - mu[:, None, :]) / sg[:, None, :] \
        + style_mu[:, None, :]
    ref_style2 = jnp.mean(y, axis=1)
    ymap = y.reshape(B, hp, wp, D)
    pooled = jnp.max(ymap.reshape(B, hp // 2, 2, wp // 2, 2, D), axis=(2, 4))
    ref_style3 = jnp.mean(pooled.reshape(B, -1, D), axis=1)
    ref_style1 = jnp.dot(ref_style2, jnp.mean(params['fpn2_w'], axis=(2, 3)),
                         precision=lax.Precision.HIGHEST) + params['fpn2_b']
    assert bool(jnp.allclose(ret['style2'], ref_style2, rtol=1e-3, atol=1e-3)), "style2"
    assert bool(jnp.allclose(ret['style3'], ref_style3, rtol=1e-3, atol=1e-3)), "style3"
    assert bool(jnp.allclose(ret['style1'], ref_style1, rtol=1e-2, atol=2e-3)), "style1"

    print("KERNEL_OK")
</pallas_src>

<mosaic_0001>
module attributes {stable_mosaic.version = 11 : i64} {
  func.func @_classifier_kernel(%arg0: i32, %arg1: memref<8x128xbf16, #tpu.memory_space<vmem>>, %arg2: memref<128x512xbf16, #tpu.memory_space<vmem>>, %arg3: memref<1x512xf32, #tpu.memory_space<vmem>>, %arg4: memref<8x512xf32, #tpu.memory_space<vmem>>) attributes {dimension_semantics = [#tpu.dimension_semantics<parallel>], iteration_bounds = array<i64: 2>, scalar_prefetch = 0 : i64, scratch_operands = 0 : i64, tpu.core_type = #tpu.core_type<tc>, window_params = [{pipeline_mode = #tpu.pipeline_mode<synchronous>, transform_indices = @transform_0, window_bounds = array<i64: 8, 128>}, {transform_indices = @transform_1, window_bounds = array<i64: 128, 512>}, {transform_indices = @transform_2, window_bounds = array<i64: 1, 512>}, {transform_indices = @transform_3, window_bounds = array<i64: 8, 512>}]} {
    %c0 = arith.constant 0 : index
    %c0_0 = arith.constant 0 : index
    %0 = vector.load %arg1[%c0, %c0_0] : memref<8x128xbf16, #tpu.memory_space<vmem>>, vector<8x128xbf16>
    %c0_1 = arith.constant 0 : index
    %c0_2 = arith.constant 0 : index
    %1 = vector.load %arg2[%c0_1, %c0_2] : memref<128x512xbf16, #tpu.memory_space<vmem>>, vector<128x512xbf16>
    %cst = arith.constant dense<0.000000e+00> : vector<8x512xf32>
    %2 = tpu.matmul %0, %1, %cst {dimension_numbers = #tpu.dot_dimension_numbers<[1], [0], [0], [1], [0, 0, 1, 1], [], []>} : vector<8x128xbf16>, vector<128x512xbf16>, vector<8x512xf32> -> vector<8x512xf32>
    %c0_3 = arith.constant 0 : index
    %c0_4 = arith.constant 0 : index
    %3 = vector.load %arg3[%c0_3, %c0_4] : memref<1x512xf32, #tpu.memory_space<vmem>>, vector<1x512xf32>
    %4 = vector.broadcast %3 : vector<1x512xf32> to vector<8x512xf32>
    %5 = arith.addf %2, %4 : vector<8x512xf32>
    %c0_5 = arith.constant 0 : index
    %c0_6 = arith.constant 0 : index
    %6 = vector.load %arg4[%c0_5, %c0_6] : memref<8x512xf32, #tpu.memory_space<vmem>>, vector<8x512xf32>
    tpu.vector_store %arg4[%c0_5, %c0_6], %5 {strides = array<i32>} : memref<8x512xf32, #tpu.memory_space<vmem>>, vector<8x512xf32>,
    return
  }
  func.func @transform_0(%arg0: i32) -> (i32, i32) {
    %c0_i32 = arith.constant 0 : i32
    %c0_i32_0 = arith.constant 0 : i32
    %c0_i32_1 = arith.constant 0 : i32
    return %c0_i32, %c0_i32_0 : i32, i32
  }
  func.func @transform_1(%arg0: i32) -> (i32, i32) {
    %c0_i32 = arith.constant 0 : i32
    %c0_i32_0 = arith.constant 0 : i32
    return %c0_i32, %arg0 : i32, i32
  }
  func.func @transform_2(%arg0: i32) -> (i32, i32) {
    %c0_i32 = arith.constant 0 : i32
    %c0_i32_0 = arith.constant 0 : i32
    return %c0_i32, %arg0 : i32, i32
  }
  func.func @transform_3(%arg0: i32) -> (i32, i32) {
    %c0_i32 = arith.constant 0 : i32
    %c0_i32_0 = arith.constant 0 : i32
    return %c0_i32, %arg0 : i32, i32
  }
}

</mosaic_0001>

<llo_original>
// kernel: tpu_custom_call.1
$region0: #{tpu_custom_call.1}
  #allocation0 [shape = 'u32[]', space=smem, size = 0x4, offset = 0x4, fixed_abs, tag = 'smem constant byte address 0x4 - core index']
  #allocation1 [shape = 'u32[144,128]{1,0:T(1,128)}', space=vmem, size = 0x12000, scoped, tag = 'internal scratch']
  %s0 = inlined_call_operand.hbm [shape: bf16[8,128], index: 0, kind: input, shape index: {}]
  %s1 = inlined_call_operand.hbm [shape: bf16[128,1024], index: 1, kind: input, shape index: {}]
  %s2 = inlined_call_operand.hbm [shape: f32[1,1024], index: 2, kind: input, shape index: {}]
  %s3 = inlined_call_operand.hbm [shape: f32[8,1024], index: 3, kind: output, shape index: {}]
  %s4 = sld [smem:[#allocation0]]
  $region57: #{tpu_custom_call.1} parent=0
    _
  %s6 = ssub.s32 1, %s4
  %s7 = scalar_select 0, %s6, %s4
  $region1: #{tpu_custom_call.1} parent=0
    #allocation2 [shape = 'u8[2048]{0}', space=vmem, size = 0x800, scoped, tag = 'input window, operand 0, single buffered']
    #allocation3 [shape = 's32[2]{0}', space=sflag, size = 0x8, scoped, tag = 'scoped memory for tpu_custom_call.1']
    #allocation4 [shape = 's32[2]{0}', space=sflag, size = 0x8, scoped, tag = 'scoped memory for tpu_custom_call.1']
    #allocation5 [shape = 'u8[262144]{0}', space=vmem, size = 0x40000, scoped, tag = 'input window, operand 1']
    #allocation6 [shape = 's32[2]{0}', space=sflag, size = 0x8, scoped, tag = 'scoped memory for tpu_custom_call.1']
    #allocation7 [shape = 'u8[4096]{0}', space=vmem, size = 0x1000, scoped, tag = 'input window, operand 2']
    #allocation8 [shape = 'u8[32768]{0}', space=vmem, size = 0x8000, scoped, tag = 'output window, operand 0']
    %8 = vsyncpa [#allocation3], 0
    %9 = vsyncpa [#allocation6], 0
    %s10 = scalar_lea.sflag [#allocation6], 1
    %11 = vsyncpa %s10, 0
    %12 = vsyncpa [#allocation4], 0
    %s13 = scalar_lea.sflag [#allocation4], 1
    %14 = vsyncpa %s13, 0
    loop: start=0, step=1, limit=4
    $region2: #{tpu_custom_call.1} parent=1 // loop_pre_header
      _
    $region3: #{tpu_custom_call.1} parent=1 // loop_header
      %s16 = sphi 0, %s20
      %p17 = scmp.ge.s32.totalorder %s16, 4
      %s24 = sphi 0, %s24
      %s26 = sphi 0, %s24
      %s27 = sphi 0, %s26
      %s41 = sphi 0, %s27
      %s47 = sphi 0, %s49
      %s50 = sphi 0, %s47
      %s51 = sphi 0, %s50
      %s67 = sphi 0, %s51
      %s73 = sphi 0, %s75
      %s76 = sphi 0, %s73
      %s77 = sphi 0, %s76
      %s93 = sphi 0, %s77
      %s99 = sphi 0, %s101
      %s102 = sphi 0, %s99
      %s103 = sphi 0, %s102
      %s119 = sphi 0, %s103
    $region4: #{tpu_custom_call.1} parent=1 // loop_header_branch
      %19 = sbr.rel (%p17) target = $region8
    $region5: #{tpu_custom_call.1} parent=1 // loop_body
      %s21 = ssub.s32 %s16, 1
      %s22 = ssub.s32 %s16, 2
      %s23 = sadd.s32 %s16, 1
      %s25 = sadd.s32 %s24, 1
      %p28 = scmp.eq.s32.totalorder %s16, 1
      %p29 = scmp.ne.s32.totalorder %s24, %s26
      %p30 = scmp.eq.s32.totalorder %s16, 0
      %p31 = por %p29, %p30
      %p32 = scmp.ne.s32.totalorder %s24, %s26
      %p33 = scmp.eq.s32.totalorder %s21, 1
      %p34 = por %p32, %p33
      %p35 = scmp.ne.s32.totalorder %s26, %s27
      %p36 = scmp.eq.s32.totalorder %s21, 0
      %p37 = por %p35, %p36
      %p38 = scmp.ne.s32.totalorder %s26, %s27
      %p39 = scmp.eq.s32.totalorder %s22, 1
      %p40 = por %p38, %p39
      %p42 = scmp.ne.s32.totalorder %s27, %s41
      %p43 = scmp.eq.s32.totalorder %s22, 0
      %p44 = por %p42, %p43
      %s45 = ssub.s32 %s16, %s23
      %p46 = scmp.eq.s32.totalorder %s45, 0
      %s48 = sadd.s32 %s47, 1
      %s49 = scalar_select %p46, %s47, %s48
      %p52 = pneg %p46
      %p53 = scmp.eq.s32.totalorder %s16, 1
      %p54 = por %p52, %p53
      %p55 = scmp.ne.s32.totalorder %s47, %s50
      %p56 = scmp.eq.s32.totalorder %s16, 0
      %p57 = por %p55, %p56
      %p58 = scmp.ne.s32.totalorder %s47, %s50
      %p59 = scmp.eq.s32.totalorder %s21, 1
      %p60 = por %p58, %p59
      %p61 = scmp.ne.s32.totalorder %s50, %s51
      %p62 = scmp.eq.s32.totalorder %s21, 0
      %p63 = por %p61, %p62
      %p64 = scmp.ne.s32.totalorder %s50, %s51
      %p65 = scmp.eq.s32.totalorder %s22, 1
      %p66 = por %p64, %p65
      %p68 = scmp.ne.s32.totalorder %s51, %s67
      %p69 = scmp.eq.s32.totalorder %s22, 0
      %p70 = por %p68, %p69
      %s71 = ssub.s32 %s16, %s23
      %p72 = scmp.eq.s32.totalorder %s71, 0
      %s74 = sadd.s32 %s73, 1
      %s75 = scalar_select %p72, %s73, %s74
      %p78 = pneg %p72
      %p79 = scmp.eq.s32.totalorder %s16, 1
      %p80 = por %p78, %p79
      %p81 = scmp.ne.s32.totalorder %s73, %s76
      %p82 = scmp.eq.s32.totalorder %s16, 0
      %p83 = por %p81, %p82
      %p84 = scmp.ne.s32.totalorder %s73, %s76
      %p85 = scmp.eq.s32.totalorder %s21, 1
      %p86 = por %p84, %p85
      %p87 = scmp.ne.s32.totalorder %s76, %s77
      %p88 = scmp.eq.s32.totalorder %s21, 0
      %p89 = por %p87, %p88
      %p90 = scmp.ne.s32.totalorder %s76, %s77
      %p91 = scmp.eq.s32.totalorder %s22, 1
      %p92 = por %p90, %p91
      %p94 = scmp.ne.s32.totalorder %s77, %s93
      %p95 = scmp.eq.s32.totalorder %s22, 0
      %p96 = por %p94, %p95
      %s97 = ssub.s32 %s16, %s23
      %p98 = scmp.eq.s32.totalorder %s97, 0
      %s100 = sadd.s32 %s99, 1
      %s101 = scalar_select %p98, %s99, %s100
      %p104 = pneg %p98
      %p105 = scmp.eq.s32.totalorder %s16, 1
      %p106 = por %p104, %p105
      %p107 = scmp.ne.s32.totalorder %s99, %s102
      %p108 = scmp.eq.s32.totalorder %s16, 0
      %p109 = por %p107, %p108
      %p110 = scmp.ne.s32.totalorder %s99, %s102
      %p111 = scmp.eq.s32.totalorder %s21, 1
      %p112 = por %p110, %p111
      %p113 = scmp.ne.s32.totalorder %s102, %s103
      %p114 = scmp.eq.s32.totalorder %s21, 0
      %p115 = por %p113, %p114
      %p116 = scmp.ne.s32.totalorder %s102, %s103
      %p117 = scmp.eq.s32.totalorder %s22, 1
      %p118 = por %p116, %p117
      %p120 = scmp.ne.s32.totalorder %s103, %s119
      %p121 = scmp.eq.s32.totalorder %s22, 0
      %p122 = por %p120, %p121
      %p123 = scmp.le.s32.totalorder 1, %s16
      %p124 = scmp.lt.s32.totalorder %s16, 3
      %p125 = pnand %p123, %p124
      %p126 = pneg %p125
      // Predicated region
      $region9: #{tpu_custom_call.1} parent=5 // pred_check
        _
      $region10: #{tpu_custom_call.1} parent=5 // pred_check_branch
        %128 = sbr.rel (%p125) target = $region12
      $region11: #{tpu_custom_call.1} parent=5 // pred_region
        %s129 = ssub.s32 %s16, 1
        // Predicated region
        $region13: #{tpu_custom_call.1} parent=11 // pred_check
          %p130 = pneg %p37
        $region14: #{tpu_custom_call.1} parent=11 // pred_check_branch
          %132 = sbr.rel (%p130) target = $region16
        $region15: #{tpu_custom_call.1} parent=11 // pred_region
          %s134 = ssub.s32 64, 64
          %135 = vsyncadd [#allocation3], %s134
          %s137 = sshll.u32 [#allocation2], 4
          %s138 = int_to_ptr.vmem [resolvable:$true] %s137
          %140 = dma.hbm_to_vmem [thread:$0]  %s0, 64, %s138, [#allocation3]
        $region16: #{tpu_custom_call.1} parent=11 // pred_fallthru
          _
      $region12: #{tpu_custom_call.1} parent=5 // pred_fallthru
        _
      %p141 = scmp.lt.s32.totalorder %s16, 2
      // Predicated region
      $region17: #{tpu_custom_call.1} parent=5 // pred_check
        %p142 = pneg %p141
      $region18: #{tpu_custom_call.1} parent=5 // pred_check_branch
        %144 = sbr.rel (%p142) target = $region20
      $region19: #{tpu_custom_call.1} parent=5 // pred_region
        // Predicated region
        $region21: #{tpu_custom_call.1} parent=19 // pred_check
          %p145 = pneg %p57
        $region22: #{tpu_custom_call.1} parent=19 // pred_check_branch
          %147 = sbr.rel (%p145) target = $region24
        $region23: #{tpu_custom_call.1} parent=19 // pred_region
          %s148 = sand.u32 %s16, 1
          %s149 = scalar_lea.sflag [#allocation6], %s148
          %s150 = sand.u32 %s47, 1
          %s151 = smul.addr %s150, 256
          %s152 = scalar_lea.vmem [#allocation5], %s151
          %s153 = smul.u32 4, %s16
          %s155 = ssub.s32 4096, 4096
          %156 = vsyncadd %s149, %s155
          %s157 = smul.addr %s153, 64
          %s158 = scalar_lea.hbm %s1, %s157
          %s159 = sshll.u32 %s152, 4
          %s160 = int_to_ptr.vmem [resolvable:$true] %s159
          %165 = dma.hbm_to_vmem [thread:$0]  %s158, 4096, %s160, %s149, 512, 256, 16
        $region24: #{tpu_custom_call.1} parent=19 // pred_fallthru
          _
        // Predicated region
        $region25: #{tpu_custom_call.1} parent=19 // pred_check
          %p166 = pneg %p83
        $region26: #{tpu_custom_call.1} parent=19 // pred_check_branch
          %168 = sbr.rel (%p166) target = $region28
        $region27: #{tpu_custom_call.1} parent=19 // pred_region
          %s169 = sand.u32 %s16, 1
          %s170 = scalar_lea.sflag [#allocation6], %s169
          %s171 = sand.u32 %s73, 1
          %s172 = smul.addr %s171, 4
          %s173 = scalar_lea.vmem [#allocation7], %s172
          %s174 = smul.u32 4, %s16
          %s176 = ssub.s32 64, 64
          %177 = vsyncadd %s170, %s176
          %s178 = smul.addr %s174, 16
          %s179 = scalar_lea.hbm %s2, %s178
          %s181 = sshll.u32 %s173, 4
          %s182 = int_to_ptr.vmem [resolvable:$true] %s181
          %184 = dma.hbm_to_vmem [thread:$0]  %s179, 64, %s182, %s170
        $region28: #{tpu_custom_call.1} parent=19 // pred_fallthru
          _
      $region20: #{tpu_custom_call.1} parent=5 // pred_fallthru
        _
      %p185 = scmp.le.s32.totalorder 1, %s16
      %p186 = scmp.lt.s32.totalorder %s16, 3
      %p187 = pnand %p185, %p186
      %p188 = pneg %p187
      // Predicated region
      $region29: #{tpu_custom_call.1} parent=5 // pred_check
        _
      $region30: #{tpu_custom_call.1} parent=5 // pred_check_branch
        %190 = sbr.rel (%p187) target = $region32
      $region31: #{tpu_custom_call.1} parent=5 // pred_region
        %s191 = ssub.s32 %s16, 1
        // Predicated region
        $region33: #{tpu_custom_call.1} parent=31 // pred_check
          %p192 = pneg %p37
        $region34: #{tpu_custom_call.1} parent=31 // pred_check_branch
          %194 = sbr.rel (%p192) target = $region36
        $region35: #{tpu_custom_call.1} parent=31 // pred_region
          %195 = dma.done [#allocation3], 64
        $region36: #{tpu_custom_call.1} parent=31 // pred_fallthru
          _
        %s196 = sand.u32 %s21, 1
        %s197 = scalar_lea.sflag [#allocation6], %s196
        %s198 = sand.u32 %s50, 1
        %s199 = smul.addr %s198, 256
        %s200 = scalar_lea.vmem [#allocation5], %s199
        // Predicated region
        $region37: #{tpu_custom_call.1} parent=31 // pred_check
          %p201 = pneg %p63
        $region38: #{tpu_custom_call.1} parent=31 // pred_check_branch
          %203 = sbr.rel (%p201) target = $region40
        $region39: #{tpu_custom_call.1} parent=31 // pred_region
          %204 = dma.done %s197, 4096
        $region40: #{tpu_custom_call.1} parent=31 // pred_fallthru
          _
        %s205 = sand.u32 %s21, 1
        %s206 = scalar_lea.sflag [#allocation6], %s205
        %s207 = sand.u32 %s76, 1
        %s208 = smul.addr %s207, 4
        %s209 = scalar_lea.vmem [#allocation7], %s208
        // Predicated region
        $region41: #{tpu_custom_call.1} parent=31 // pred_check
          %p210 = pneg %p89
        $region42: #{tpu_custom_call.1} parent=31 // pred_check_branch
          %212 = sbr.rel (%p210) target = $region44
        $region43: #{tpu_custom_call.1} parent=31 // pred_region
          %213 = dma.done %s206, 64
        $region44: #{tpu_custom_call.1} parent=31 // pred_fallthru
          _
        %p214 = pneg %p37
        %p215 = pneg %p34
        %s216 = sand.u32 %s21, 1
        %s217 = scalar_lea.sflag [#allocation6], %s216
        %s218 = sand.u32 %s50, 1
        %s219 = smul.addr %s218, 256
        %s220 = scalar_lea.vmem [#allocation5], %s219
        %p221 = pneg %p63
        %p222 = pneg %p60
        %s223 = sand.u32 %s21, 1
        %s224 = scalar_lea.sflag [#allocation6], %s223
        %s225 = sand.u32 %s76, 1
        %s226 = smul.addr %s225, 4
        %s227 = scalar_lea.vmem [#allocation7], %s226
        %p228 = pneg %p89
        %p229 = pneg %p86
        %p230 = pneg %p115
        %p231 = pneg %p112
        %s232 = sand.u32 %s102, 1
        %s233 = scalar_lea.sflag [#allocation4], %s232
        %s234 = sand.u32 %s102, 1
        %s235 = smul.addr %s234, 32
        %s236 = scalar_lea.vmem [#allocation8], %s235
        %s237 = smul.u32 4, %s21
        %s238 = smul.u32 4, %s21
        %s239 = smul.u32 4, %s21
        %v241 = vld [vmem:[#allocation2] sm:$0xf]
        %v242 = vld [vmem:[%s200] sm:$0xff]
        %v243 = vld [vmem:[%s200 + $0x8] sm:$0xff]
        %v244 = vld [vmem:[%s200 + $0x10] sm:$0xff]
        %v245 = vld [vmem:[%s200 + $0x18] sm:$0xff]
        %v246 = vld [vmem:[%s200 + $0x20] sm:$0xff]
        %v247 = vld [vmem:[%s200 + $0x28] sm:$0xff]
        %v248 = vld [vmem:[%s200 + $0x30] sm:$0xff]
        %v249 = vld [vmem:[%s200 + $0x38] sm:$0xff]
        %v250 = vld [vmem:[%s200 + $0x40] sm:$0xff]
        %v251 = vld [vmem:[%s200 + $0x48] sm:$0xff]
        %v252 = vld [vmem:[%s200 + $0x50] sm:$0xff]
        %v253 = vld [vmem:[%s200 + $0x58] sm:$0xff]
        %v254 = vld [vmem:[%s200 + $0x60] sm:$0xff]
        %v255 = vld [vmem:[%s200 + $0x68] sm:$0xff]
        %v256 = vld [vmem:[%s200 + $0x70] sm:$0xff]
        %v257 = vld [vmem:[%s200 + $0x78] sm:$0xff]
        %v258 = vld [vmem:[%s200 + $0x80] sm:$0xff]
        %v259 = vld [vmem:[%s200 + $0x88] sm:$0xff]
        %v260 = vld [vmem:[%s200 + $0x90] sm:$0xff]
        %v261 = vld [vmem:[%s200 + $0x98] sm:$0xff]
        %v262 = vld [vmem:[%s200 + $0xa0] sm:$0xff]
        %v263 = vld [vmem:[%s200 + $0xa8] sm:$0xff]
        %v264 = vld [vmem:[%s200 + $0xb0] sm:$0xff]
        %v265 = vld [vmem:[%s200 + $0xb8] sm:$0xff]
        %v266 = vld [vmem:[%s200 + $0xc0] sm:$0xff]
        %v267 = vld [vmem:[%s200 + $0xc8] sm:$0xff]
        %v268 = vld [vmem:[%s200 + $0xd0] sm:$0xff]
        %v269 = vld [vmem:[%s200 + $0xd8] sm:$0xff]
        %v270 = vld [vmem:[%s200 + $0xe0] sm:$0xff]
        %v271 = vld [vmem:[%s200 + $0xe8] sm:$0xff]
        %v272 = vld [vmem:[%s200 + $0xf0] sm:$0xff]
        %v273 = vld [vmem:[%s200 + $0xf8] sm:$0xff]
        %v274 = vld [vmem:[%s209] sm:$0xf]
        %v276 = vlaneseq
        %v277 = vshrl.u32 %v276, 7
        %v278 = vsub.s32 0, %v277
        %v279 = vrot.slane %v274, %v278
        %v280 = vlaneseq
        %v281 = vshrl.u32 %v280, 7
        %v282 = vsub.s32 1, %v281
        %v283 = vrot.slane %v274, %v282
        %v284 = vlaneseq
        %v285 = vshrl.u32 %v284, 7
        %v286 = vsub.s32 2, %v285
        %v287 = vrot.slane %v274, %v286
        %v288 = vlaneseq
        %v289 = vshrl.u32 %v288, 7
        %v290 = vsub.s32 3, %v289
        %v291 = vrot.slane %v274, %v290
        %v328 = vunpack.c.l.b16 %v242
        %v329 = vunpack.c.h.b16 %v242
        %v330 = vunpack.c.l.b16 %v243
        %v331 = vunpack.c.h.b16 %v243
        %v332 = vunpack.c.l.b16 %v244
        %v333 = vunpack.c.h.b16 %v244
        %v334 = vunpack.c.l.b16 %v245
        %v335 = vunpack.c.h.b16 %v245
        %v336 = vunpack.c.l.b16 %v246
        %v337 = vunpack.c.h.b16 %v246
        %v338 = vunpack.c.l.b16 %v247
        %v339 = vunpack.c.h.b16 %v247
        %v340 = vunpack.c.l.b16 %v248
        %v341 = vunpack.c.h.b16 %v248
        %v342 = vunpack.c.l.b16 %v249
        %v343 = vunpack.c.h.b16 %v249
        %v344 = vunpack.c.l.b16 %v250
        %v345 = vunpack.c.h.b16 %v250
        %v346 = vunpack.c.l.b16 %v251
        %v347 = vunpack.c.h.b16 %v251
        %v348 = vunpack.c.l.b16 %v252
        %v349 = vunpack.c.h.b16 %v252
        %v350 = vunpack.c.l.b16 %v253
        %v351 = vunpack.c.h.b16 %v253
        %v352 = vunpack.c.l.b16 %v254
        %v353 = vunpack.c.h.b16 %v254
        %v354 = vunpack.c.l.b16 %v255
        %v355 = vunpack.c.h.b16 %v255
        %v356 = vunpack.c.l.b16 %v256
        %v357 = vunpack.c.h.b16 %v256
        %v358 = vunpack.c.l.b16 %v257
        %v359 = vunpack.c.h.b16 %v257
        %v360 = vunpack.c.l.b16 %v258
        %v361 = vunpack.c.h.b16 %v258
        %v362 = vunpack.c.l.b16 %v259
        %v363 = vunpack.c.h.b16 %v259
        %v364 = vunpack.c.l.b16 %v260
        %v365 = vunpack.c.h.b16 %v260
        %v366 = vunpack.c.l.b16 %v261
        %v367 = vunpack.c.h.b16 %v261
        %v368 = vunpack.c.l.b16 %v262
        %v369 = vunpack.c.h.b16 %v262
        %v370 = vunpack.c.l.b16 %v263
        %v371 = vunpack.c.h.b16 %v263
        %v372 = vunpack.c.l.b16 %v264
        %v373 = vunpack.c.h.b16 %v264
        %v374 = vunpack.c.l.b16 %v265
        %v375 = vunpack.c.h.b16 %v265
        %v376 = vunpack.c.l.b16 %v266
        %v377 = vunpack.c.h.b16 %v266
        %v378 = vunpack.c.l.b16 %v267
        %v379 = vunpack.c.h.b16 %v267
        %v380 = vunpack.c.l.b16 %v268
        %v381 = vunpack.c.h.b16 %v268
        %v382 = vunpack.c.l.b16 %v269
        %v383 = vunpack.c.h.b16 %v269
        %v384 = vunpack.c.l.b16 %v270
        %v385 = vunpack.c.h.b16 %v270
        %v386 = vunpack.c.l.b16 %v271
        %v387 = vunpack.c.h.b16 %v271
        %v388 = vunpack.c.l.b16 %v272
        %v389 = vunpack.c.h.b16 %v272
        %v390 = vunpack.c.l.b16 %v273
        %v391 = vunpack.c.h.b16 %v273
        %v392 = vpack.c.b16 %v332, %v328
        %v393 = vpack.c.b16 %v333, %v329
        %v394 = vpack.c.b16 %v334, %v330
        %v395 = vpack.c.b16 %v335, %v331
        %v396 = vpack.c.b16 %v340, %v336
        %v397 = vpack.c.b16 %v341, %v337
        %v398 = vpack.c.b16 %v342, %v338
        %v399 = vpack.c.b16 %v343, %v339
        %v400 = vpack.c.b16 %v348, %v344
        %v401 = vpack.c.b16 %v349, %v345
        %v402 = vpack.c.b16 %v350, %v346
        %v403 = vpack.c.b16 %v351, %v347
        %v404 = vpack.c.b16 %v356, %v352
        %v405 = vpack.c.b16 %v357, %v353
        %v406 = vpack.c.b16 %v358, %v354
        %v407 = vpack.c.b16 %v359, %v355
        %v408 = vpack.c.b16 %v364, %v360
        %v409 = vpack.c.b16 %v365, %v361
        %v410 = vpack.c.b16 %v366, %v362
        %v411 = vpack.c.b16 %v367, %v363
        %v412 = vpack.c.b16 %v372, %v368
        %v413 = vpack.c.b16 %v373, %v369
        %v414 = vpack.c.b16 %v374, %v370
        %v415 = vpack.c.b16 %v375, %v371
        %v416 = vpack.c.b16 %v380, %v376
        %v417 = vpack.c.b16 %v381, %v377
        %v418 = vpack.c.b16 %v382, %v378
        %v419 = vpack.c.b16 %v383, %v379
        %v420 = vpack.c.b16 %v388, %v384
        %v421 = vpack.c.b16 %v389, %v385
        %v422 = vpack.c.b16 %v390, %v386
        %v423 = vpack.c.b16 %v391, %v387
        %456 = vmatprep.subr.bf16.mxu0 %v393
        %457 = vmatpush1.bf16.msra.mxu0 %v392
        %458 = vmatprep.subr.bf16.mxu0 %v397
        %459 = vmatpush1.bf16.msra.mxu0 %v396
        %460 = vmatprep.subr.bf16.mxu0 %v401
        %461 = vmatpush1.bf16.msra.mxu0 %v400
        %462 = vmatprep.subr.bf16.mxu0 %v405
        %463 = vmatpush1.bf16.msra.mxu0 %v404
        %464 = vmatprep.subr.bf16.mxu0 %v409
        %465 = vmatpush1.bf16.msra.mxu0 %v408
        %466 = vmatprep.subr.bf16.mxu0 %v413
        %467 = vmatpush1.bf16.msra.mxu0 %v412
        %468 = vmatprep.subr.bf16.mxu0 %v417
        %469 = vmatpush1.bf16.msra.mxu0 %v416
        %470 = vmatprep.subr.bf16.mxu0 %v421
        %471 = vmatpush1.bf16.msra.mxu0 %v420
        %472 = vmatprep.subr.bf16.mxu0 0
        %473 = vmatpush1.bf16.msra.mxu0 0
        %474 = vmatprep.subr.bf16.mxu0 0
        %475 = vmatpush1.bf16.msra.mxu0 0
        %476 = vmatprep.subr.bf16.mxu0 0
        %477 = vmatpush1.bf16.msra.mxu0 0
        %478 = vmatprep.subr.bf16.mxu0 0
        %479 = vmatpush1.bf16.msra.mxu0 0
        %480 = vmatprep.subr.bf16.mxu0 0
        %481 = vmatpush1.bf16.msra.mxu0 0
        %482 = vmatprep.subr.bf16.mxu0 0
        %483 = vmatpush1.bf16.msra.mxu0 0
        %484 = vmatprep.subr.bf16.mxu0 0
        %485 = vmatpush1.bf16.msra.mxu0 0
        %486 = vmatprep.subr.bf16.mxu0 0
        %487 = vmatpush1.bf16.msra.mxu0 0
        %488 = vmatprep.mubr.bf16.mxu0 0
        %489 = vmatmul.mubr.bf16.gmra.mrb[0].mxu0 %v241
        %v490 = vpop.f32.mrb[0].mxu0
        %v491 = vadd.f32 %v279, %v490
        %v492 = vpop.f32.mrb[0].mxu0
        %v493 = vadd.f32 %v283, %v492
        %v494 = vpop.f32.mrb[0].mxu0
        %v495 = vpop.f32.mrb[0].mxu0
        %496 = vdwg.mxu0
        %497 = vmatprep.subr.bf16.mxu0 %v395
        %498 = vmatpush1.bf16.msra.mxu0 %v394
        %499 = vmatprep.subr.bf16.mxu0 %v399
        %500 = vmatpush1.bf16.msra.mxu0 %v398
        %501 = vmatprep.subr.bf16.mxu0 %v403
        %502 = vmatpush1.bf16.msra.mxu0 %v402
        %503 = vmatprep.subr.bf16.mxu0 %v407
        %504 = vmatpush1.bf16.msra.mxu0 %v406
        %505 = vmatprep.subr.bf16.mxu0 %v411
        %506 = vmatpush1.bf16.msra.mxu0 %v410
        %507 = vmatprep.subr.bf16.mxu0 %v415
        %508 = vmatpush1.bf16.msra.mxu0 %v414
        %509 = vmatprep.subr.bf16.mxu0 %v419
        %510 = vmatpush1.bf16.msra.mxu0 %v418
        %511 = vmatprep.subr.bf16.mxu0 %v423
        %512 = vmatpush1.bf16.msra.mxu0 %v422
        %513 = vmatprep.subr.bf16.mxu0 0
        %514 = vmatpush1.bf16.msra.mxu0 0
        %515 = vmatprep.subr.bf16.mxu0 0
        %516 = vmatpush1.bf16.msra.mxu0 0
        %517 = vmatprep.subr.bf16.mxu0 0
        %518 = vmatpush1.bf16.msra.mxu0 0
        %519 = vmatprep.subr.bf16.mxu0 0
        %520 = vmatpush1.bf16.msra.mxu0 0
        %521 = vmatprep.subr.bf16.mxu0 0
        %522 = vmatpush1.bf16.msra.mxu0 0
        %523 = vmatprep.subr.bf16.mxu0 0
        %524 = vmatpush1.bf16.msra.mxu0 0
        %525 = vmatprep.subr.bf16.mxu0 0
        %526 = vmatpush1.bf16.msra.mxu0 0
        %527 = vmatprep.subr.bf16.mxu0 0
        %528 = vmatpush1.bf16.msra.mxu0 0
        %529 = vmatprep.mubr.bf16.mxu0 0
        %530 = vmatmul.mubr.bf16.gmra.mrb[0].mxu0 %v241
        %v531 = vpop.f32.mrb[0].mxu0
        %v532 = vadd.f32 %v287, %v531
        %v533 = vpop.f32.mrb[0].mxu0
        %v534 = vadd.f32 %v291, %v533
        %v535 = vpop.f32.mrb[0].mxu0
        %v536 = vpop.f32.mrb[0].mxu0
        %537 = vdwg.mxu0
        %538 = vst [vmem:[%s236] sm:$0xff] %v491
        %539 = vst [vmem:[%s236 + $0x8] sm:$0xff] %v493
        %540 = vst [vmem:[%s236 + $0x10] sm:$0xff] %v532
        %541 = vst [vmem:[%s236 + $0x18] sm:$0xff] %v534
        %s542 = sand.u32 %s102, 1
        %s543 = scalar_lea.sflag [#allocation4], %s542
        %s544 = sand.u32 %s102, 1
        %s545 = smul.addr %s544, 32
        %s546 = scalar_lea.vmem [#allocation8], %s545
        // Predicated region
        $region45: #{tpu_custom_call.1} parent=31 // pred_check
          %p547 = pneg %p112
        $region46: #{tpu_custom_call.1} parent=31 // pred_check_branch
          %549 = sbr.rel (%p547) target = $region48
        $region47: #{tpu_custom_call.1} parent=31 // pred_region
          %s550 = smul.u32 4, %s21
          %s552 = ssub.s32 512, 512
          %553 = vsyncadd %s543, %s552
          %s554 = smul.addr %s550, 128
          %s555 = scalar_lea.hbm %s3, %s554
          %s557 = sshll.u32 %s546, 4
          %s558 = int_to_ptr.vmem [resolvable:$true] %s557
          %560 = dma.vmem_to_hbm [thread:$0]  %s558, 512, %s555, %s543
        $region48: #{tpu_custom_call.1} parent=31 // pred_fallthru
          _
      $region32: #{tpu_custom_call.1} parent=5 // pred_fallthru
        _
      %p561 = scmp.le.s32.totalorder 2, %s16
      // Predicated region
      $region49: #{tpu_custom_call.1} parent=5 // pred_check
        %p562 = pneg %p561
      $region50: #{tpu_custom_call.1} parent=5 // pred_check_branch
        %564 = sbr.rel (%p562) target = $region52
      $region51: #{tpu_custom_call.1} parent=5 // pred_region
        %s565 = ssub.s32 %s16, 2
        // Predicated region
        $region53: #{tpu_custom_call.1} parent=51 // pred_check
          %p566 = pneg %p118
        $region54: #{tpu_custom_call.1} parent=51 // pred_check_branch
          %568 = sbr.rel (%p566) target = $region56
        $region55: #{tpu_custom_call.1} parent=51 // pred_region
          %s569 = sand.u32 %s103, 1
          %s570 = scalar_lea.sflag [#allocation4], %s569
          %s571 = sand.u32 %s103, 1
          %s572 = smul.addr %s571, 32
          %s573 = scalar_lea.vmem [#allocation8], %s572
          %574 = dma.done %s570, 512
        $region56: #{tpu_custom_call.1} parent=51 // pred_fallthru
          _
      $region52: #{tpu_custom_call.1} parent=5 // pred_fallthru
        _
    $region6: #{tpu_custom_call.1} parent=1 // loop_footer
      %s20 = sadd.s32 1, %s16
    $region7: #{tpu_custom_call.1} parent=1 // loop_footer_branch
      %15 = sbr.rel target = $region3
    $region8: #{tpu_custom_call.1} parent=1 // loop_exit
      _
    %575 = vsyncpa [#allocation3], 1
    %s576 = scalar_lea.sflag [#allocation3], 1
    %577 = vsyncpa %s576, 1
    %578 = vsyncpa [#allocation6], 1
    %s579 = scalar_lea.sflag [#allocation6], 1
    %580 = vsyncpa %s579, 1
    %581 = vsyncpa [#allocation4], 1
    %s582 = scalar_lea.sflag [#allocation4], 1
    %583 = vsyncpa %s582, 1

</llo_original>
